<compile_context>
chip_gen: v5e
topology: v5e:2x2
jax: 0.10.0
libtpu: 0.0.40
codegen_flags: <defaults>
</compile_context>

<pallas_src>
import jax
import jax.numpy as jnp
from jax import lax
from jax.experimental import pallas as pl
from jax.experimental.pallas import tpu as pltpu


def policy_kernel(s_ref, w1_ref, b1_ref, w2_ref, b2_ref, w3_ref, b3_ref, out_ref):
    # --- self.net ---
    # Linear(s_dim, h_dim) + ReLU   (bf16 MXU, f32 accumulate)
    h1 = jnp.dot(s_ref[...], w1_ref[...],
                 preferred_element_type=jnp.float32) + b1_ref[...]
    h1 = jnp.maximum(h1, 0.0)
    # Linear(h_dim, a_dim//4) + LeakyReLU(0.2)
    h2 = jnp.dot(h1.astype(jnp.bfloat16), w2_ref[...],
                 preferred_element_type=jnp.float32) + b2_ref[...]
    h2 = jnp.where(h2 >= 0.0, h2, 0.2 * h2)

    # --- fused per-head logit differences, already interleaved ---
    # w3 column 2j   =  (w3e[:, j] - w3o[:, j]),  b3[2j]   =  (b3e[j] - b3o[j])
    # w3 column 2j+1 = -(w3e[:, j] - w3o[:, j]),  b3[2j+1] = -(b3e[j] - b3o[j])
    # => d[:, 2j] = l0_j - l1_j and d[:, 2j+1] = -(l0_j - l1_j) exactly.
    d = jnp.dot(h2.astype(jnp.bfloat16), w3_ref[...],
                preferred_element_type=jnp.float32) + b3_ref[...]

    # --- GumbelConnector.forward_ST ('soft') forward value ---
    # one_hot(argmax(softmax(l/T))) == one_hot(argmax(l)) for T > 0;
    # torch.max picks the first index on ties -> class 0 wins ties.
    lane = lax.broadcasted_iota(jnp.int32, d.shape, 1)
    is_class0 = (lane % 2) == 0
    ge = (d >= 0.0).astype(jnp.float32)   # class-0 slot: 1 iff l0 >= l1
    gt = (d > 0.0).astype(jnp.float32)    # class-1 slot: 1 iff l1 >  l0 (since d_odd = -d_even)
    out_ref[...] = jnp.where(is_class0, ge, gt).astype(out_ref.dtype)


def multi_discrete_policy_forward(s, packed, temperature, *, block_b=128):
    """s: [B, s_dim] float32 -> action_rep: [B, 2*a_dim] float32 (one-hot pairs)."""
    if temperature <= 0:
        raise ValueError("temperature must be > 0")  # argmax identity only holds for T > 0
    B, s_dim = s.shape
    h_dim = packed["w1"].shape[1]
    h2_dim = packed["w2"].shape[1]
    two_a = packed["w3"].shape[1]

    tb = min(block_b, B)
    pad = (-B) % tb
    if pad:
        s = jnp.pad(s, ((0, pad), (0, 0)))
    bp = B + pad

    out = pl.pallas_call(
        policy_kernel,
        out_shape=jax.ShapeDtypeStruct((bp, two_a), jnp.float32),
        grid_spec=pltpu.PrefetchScalarGridSpec(
            num_scalar_prefetch=0,
            grid=(bp // tb,),
            in_specs=[
                pl.BlockSpec((tb, s_dim), lambda i: (i, 0)),
                pl.BlockSpec((s_dim, h_dim), lambda i: (0, 0)),
                pl.BlockSpec((1, h_dim), lambda i: (0, 0)),
                pl.BlockSpec((h_dim, h2_dim), lambda i: (0, 0)),
                pl.BlockSpec((1, h2_dim), lambda i: (0, 0)),
                pl.BlockSpec((h2_dim, two_a), lambda i: (0, 0)),
                pl.BlockSpec((1, two_a), lambda i: (0, 0)),
            ],
            out_specs=pl.BlockSpec((tb, two_a), lambda i: (i, 0)),
        ),
        compiler_params=pltpu.CompilerParams(
            dimension_semantics=("parallel",),
        ),
    )(s.astype(jnp.bfloat16),
      packed["w1"], packed["b1"],
      packed["w2"], packed["b2"],
      packed["w3"], packed["b3"])
    return out if pad == 0 else out[:B]


def init_params(key, s_dim, h_dim, a_dim):
    """Deterministic PyTorch-style Linear init (uniform(-1/sqrt(fan_in), 1/sqrt(fan_in)))."""
    h2 = a_dim // 4
    ks = jax.random.split(key, 8)

    def lin(kw, kb, fan_in, fan_out):
        bound = 1.0 / jnp.sqrt(jnp.float32(fan_in))
        w = jax.random.uniform(kw, (fan_in, fan_out), jnp.float32, -bound, bound)
        b = jax.random.uniform(kb, (1, fan_out), jnp.float32, -bound, bound)
        return w, b

    w1, b1 = lin(ks[0], ks[1], s_dim, h_dim)
    w2, b2 = lin(ks[2], ks[3], h_dim, h2)
    # a_dim heads of Linear(h2, 2): column j of w3e/w3o is head j's class-0/class-1 weight.
    w3e, b3e = lin(ks[4], ks[5], h2, a_dim)
    w3o, b3o = lin(ks[6], ks[7], h2, a_dim)
    return dict(w1=w1, b1=b1, w2=w2, b2=b2,
                w3e=w3e, b3e=b3e, w3o=w3o, b3o=b3o)


def pack_params(p):
    """One-time host-side packing: fuse heads into difference weights (interleaved
    columns so the kernel's output is already in torch.cat order) and cast the
    matmul weights to bf16 (biases stay f32; they are added post-accumulation)."""
    wd = p["w3e"] - p["w3o"]          # [h2, a_dim]
    bd = p["b3e"] - p["b3o"]          # [1, a_dim]
    h2_dim, a_dim = wd.shape
    w3 = jnp.stack([wd, -wd], axis=-1).reshape(h2_dim, 2 * a_dim)
    b3 = jnp.stack([bd, -bd], axis=-1).reshape(1, 2 * a_dim)
    return dict(
        w1=p["w1"].astype(jnp.bfloat16), b1=p["b1"].astype(jnp.float32),
        w2=p["w2"].astype(jnp.bfloat16), b2=p["b2"].astype(jnp.float32),
        w3=w3.astype(jnp.bfloat16), b3=b3.astype(jnp.float32),
    )


def reference_forward(s, p, temperature):
    """Pure-f32 reference of the PyTorch forward. Returns (action_rep, l0 - l1)."""
    h1 = jnp.maximum(s @ p["w1"] + p["b1"], 0.0)
    z = h1 @ p["w2"] + p["b2"]
    h2 = jnp.where(z >= 0.0, z, 0.2 * z)
    l0 = h2 @ p["w3e"] + p["b3e"]
    l1 = h2 @ p["w3o"] + p["b3o"]
    # softmax(l / T) preserves argmax for T > 0; torch.max ties -> class 0.
    hard0 = (l0 >= l1).astype(jnp.float32)
    hard = jnp.stack([hard0, 1.0 - hard0], axis=-1).reshape(s.shape[0], -1)
    return hard, l0 - l1


if __name__ == "__main__":
    # Small config consistent with the module: s_dim, h_dim, a_dim (heads), T.
    # Batch 256 (2 grid tiles of 128) to exercise the batched, pipelined grid.
    B, S_DIM, H_DIM, A_DIM = 256, 32, 32, 128
    TEMPERATURE = 0.8  # cfg.temperature; cfg.argmax_type == 'soft'

    key = jax.random.PRNGKey(0)
    k_params, k_s = jax.random.split(key)
    params = init_params(k_params, S_DIM, H_DIM, A_DIM)
    s = jax.random.normal(k_s, (B, S_DIM), jnp.float32)

    packed = pack_params(params)
    action_rep = multi_discrete_policy_forward(s, packed, TEMPERATURE)
    action_rep = jax.block_until_ready(action_rep)

    ref, diff = reference_forward(s, params, TEMPERATURE)
    assert action_rep.shape == (B, 2 * A_DIM)
    # each 2-wide head output must be a valid one-hot (exact: odd logit == -even logit)
    assert bool(jnp.all(action_rep.reshape(B, A_DIM, 2).sum(-1) == 1.0))
    # bf16-MXU kernel vs f32 reference: argmax must match everywhere except at
    # near-ties of the f32 logits (tolerance-aware tie check).
    absdiff = jnp.repeat(jnp.abs(diff), 2, axis=-1)          # align [B, a] -> [B, 2a]
    tol = 2e-2 * (1.0 + jnp.max(jnp.abs(diff)))
    mismatch = action_rep != ref
    assert bool(jnp.all(jnp.logical_or(~mismatch, absdiff <= tol))), \
        "mismatch vs reference outside tie tolerance"

    print("KERNEL_OK")
</pallas_src>

<mosaic_0001>
module attributes {stable_mosaic.version = 11 : i64} {
  func.func @policy_kernel(%arg0: i32, %arg1: memref<128x32xbf16, #tpu.memory_space<vmem>>, %arg2: memref<32x32xbf16, #tpu.memory_space<vmem>>, %arg3: memref<1x32xf32, #tpu.memory_space<vmem>>, %arg4: memref<32x32xbf16, #tpu.memory_space<vmem>>, %arg5: memref<1x32xf32, #tpu.memory_space<vmem>>, %arg6: memref<32x256xbf16, #tpu.memory_space<vmem>>, %arg7: memref<1x256xf32, #tpu.memory_space<vmem>>, %arg8: memref<128x256xf32, #tpu.memory_space<vmem>>) attributes {dimension_semantics = [#tpu.dimension_semantics<parallel>], iteration_bounds = array<i64: 2>, scalar_prefetch = 0 : i64, scratch_operands = 0 : i64, tpu.core_type = #tpu.core_type<tc>, window_params = [{transform_indices = @transform_0, window_bounds = array<i64: 128, 32>}, {pipeline_mode = #tpu.pipeline_mode<synchronous>, transform_indices = @transform_1, window_bounds = array<i64: 32, 32>}, {pipeline_mode = #tpu.pipeline_mode<synchronous>, transform_indices = @transform_2, window_bounds = array<i64: 1, 32>}, {pipeline_mode = #tpu.pipeline_mode<synchronous>, transform_indices = @transform_3, window_bounds = array<i64: 32, 32>}, {pipeline_mode = #tpu.pipeline_mode<synchronous>, transform_indices = @transform_4, window_bounds = array<i64: 1, 32>}, {pipeline_mode = #tpu.pipeline_mode<synchronous>, transform_indices = @transform_5, window_bounds = array<i64: 32, 256>}, {pipeline_mode = #tpu.pipeline_mode<synchronous>, transform_indices = @transform_6, window_bounds = array<i64: 1, 256>}, {transform_indices = @transform_7, window_bounds = array<i64: 128, 256>}]} {
    %c0 = arith.constant 0 : index
    %c0_0 = arith.constant 0 : index
    %0 = vector.load %arg1[%c0, %c0_0] : memref<128x32xbf16, #tpu.memory_space<vmem>>, vector<128x32xbf16>
    %c0_1 = arith.constant 0 : index
    %c0_2 = arith.constant 0 : index
    %1 = vector.load %arg2[%c0_1, %c0_2] : memref<32x32xbf16, #tpu.memory_space<vmem>>, vector<32x32xbf16>
    %cst = arith.constant dense<0.000000e+00> : vector<128x32xf32>
    %2 = tpu.matmul %0, %1, %cst {dimension_numbers = #tpu.dot_dimension_numbers<[1], [0], [0], [1], [0, 0, 1, 1], [], []>} : vector<128x32xbf16>, vector<32x32xbf16>, vector<128x32xf32> -> vector<128x32xf32>
    %c0_3 = arith.constant 0 : index
    %c0_4 = arith.constant 0 : index
    %3 = vector.load %arg3[%c0_3, %c0_4] : memref<1x32xf32, #tpu.memory_space<vmem>>, vector<1x32xf32>
    %4 = vector.broadcast %3 : vector<1x32xf32> to vector<128x32xf32>
    %5 = arith.addf %2, %4 : vector<128x32xf32>
    %cst_5 = arith.constant 0.000000e+00 : f32
    %6 = vector.broadcast %cst_5 : f32 to vector<128x32xf32>
    %7 = arith.maximumf %5, %6 : vector<128x32xf32>
    %8 = arith.truncf %7 : vector<128x32xf32> to vector<128x32xbf16>
    %c0_6 = arith.constant 0 : index
    %c0_7 = arith.constant 0 : index
    %9 = vector.load %arg4[%c0_6, %c0_7] : memref<32x32xbf16, #tpu.memory_space<vmem>>, vector<32x32xbf16>
    %cst_8 = arith.constant dense<0.000000e+00> : vector<128x32xf32>
    %10 = tpu.matmul %8, %9, %cst_8 {dimension_numbers = #tpu.dot_dimension_numbers<[1], [0], [0], [1], [0, 0, 1, 1], [], []>} : vector<128x32xbf16>, vector<32x32xbf16>, vector<128x32xf32> -> vector<128x32xf32>
    %c0_9 = arith.constant 0 : index
    %c0_10 = arith.constant 0 : index
    %11 = vector.load %arg5[%c0_9, %c0_10] : memref<1x32xf32, #tpu.memory_space<vmem>>, vector<1x32xf32>
    %12 = vector.broadcast %11 : vector<1x32xf32> to vector<128x32xf32>
    %13 = arith.addf %10, %12 : vector<128x32xf32>
    %cst_11 = arith.constant 0.000000e+00 : f32
    %14 = vector.broadcast %cst_11 : f32 to vector<128x32xf32>
    %15 = arith.cmpf oge, %13, %14 : vector<128x32xf32>
    %cst_12 = arith.constant 2.000000e-01 : f32
    %16 = vector.broadcast %cst_12 : f32 to vector<128x32xf32>
    %17 = arith.mulf %16, %13 : vector<128x32xf32>
    %18 = arith.select %15, %13, %17 : vector<128x32xi1>, vector<128x32xf32>
    %19 = arith.truncf %18 : vector<128x32xf32> to vector<128x32xbf16>
    %c0_13 = arith.constant 0 : index
    %c0_14 = arith.constant 0 : index
    %20 = vector.load %arg6[%c0_13, %c0_14] : memref<32x256xbf16, #tpu.memory_space<vmem>>, vector<32x256xbf16>
    %cst_15 = arith.constant dense<0.000000e+00> : vector<128x256xf32>
    %21 = tpu.matmul %19, %20, %cst_15 {dimension_numbers = #tpu.dot_dimension_numbers<[1], [0], [0], [1], [0, 0, 1, 1], [], []>} : vector<128x32xbf16>, vector<32x256xbf16>, vector<128x256xf32> -> vector<128x256xf32>
    %c0_16 = arith.constant 0 : index
    %c0_17 = arith.constant 0 : index
    %22 = vector.load %arg7[%c0_16, %c0_17] : memref<1x256xf32, #tpu.memory_space<vmem>>, vector<1x256xf32>
    %23 = vector.broadcast %22 : vector<1x256xf32> to vector<128x256xf32>
    %24 = arith.addf %21, %23 : vector<128x256xf32>
    %25 = tpu.iota {dimensions = array<i32: 1>} : vector<128x256xi32>
    %c2_i32 = arith.constant 2 : i32
    %c0_i32 = arith.constant 0 : i32
    %26 = arith.cmpi eq, %c2_i32, %c0_i32 : i32
    %c1_i32 = arith.constant 1 : i32
    %27 = arith.select %26, %c1_i32, %c2_i32 : i32
    %28 = vector.broadcast %27 : i32 to vector<128x256xi32>
    %29 = arith.remsi %25, %28 : vector<128x256xi32>
    %c0_i32_18 = arith.constant 0 : i32
    %30 = vector.broadcast %c0_i32_18 : i32 to vector<128x256xi32>
    %31 = arith.cmpi ne, %29, %30 : vector<128x256xi32>
    %c0_i32_19 = arith.constant 0 : i32
    %32 = vector.broadcast %c0_i32_19 : i32 to vector<128x256xi32>
    %33 = arith.cmpi slt, %29, %32 : vector<128x256xi32>
    %c0_i32_20 = arith.constant 0 : i32
    %34 = arith.cmpi slt, %27, %c0_i32_20 : i32
    %35 = vector.broadcast %34 : i1 to vector<128x256xi1>
    %36 = vector.broadcast %35 : vector<128x256xi1> to vector<128x256xi1>
    %37 = arith.xori %33, %36 : vector<128x256xi1>
    %38 = arith.andi %37, %31 : vector<128x256xi1>
    %39 = vector.broadcast %27 : i32 to vector<128x256xi32>
    %40 = arith.addi %29, %39 : vector<128x256xi32>
    %41 = arith.select %38, %40, %29 : vector<128x256xi1>, vector<128x256xi32>
    %c0_i32_21 = arith.constant 0 : i32
    %42 = vector.broadcast %c0_i32_21 : i32 to vector<128x256xi32>
    %43 = arith.cmpi eq, %41, %42 : vector<128x256xi32>
    %cst_22 = arith.constant 0.000000e+00 : f32
    %44 = vector.broadcast %cst_22 : f32 to vector<128x256xf32>
    %45 = arith.cmpf oge, %24, %44 : vector<128x256xf32>
    %46 = arith.extui %45 : vector<128x256xi1> to vector<128x256xi32>
    %47 = arith.sitofp %46 : vector<128x256xi32> to vector<128x256xf32>
    %cst_23 = arith.constant 0.000000e+00 : f32
    %48 = vector.broadcast %cst_23 : f32 to vector<128x256xf32>
    %49 = arith.cmpf ogt, %24, %48 : vector<128x256xf32>
    %50 = arith.extui %49 : vector<128x256xi1> to vector<128x256xi32>
    %51 = arith.sitofp %50 : vector<128x256xi32> to vector<128x256xf32>
    %52 = arith.select %43, %47, %51 : vector<128x256xi1>, vector<128x256xf32>
    %c0_24 = arith.constant 0 : index
    %c0_25 = arith.constant 0 : index
    %53 = vector.load %arg8[%c0_24, %c0_25] : memref<128x256xf32, #tpu.memory_space<vmem>>, vector<128x256xf32>
    tpu.vector_store %arg8[%c0_24, %c0_25], %52 {strides = array<i32>} : memref<128x256xf32, #tpu.memory_space<vmem>>, vector<128x256xf32>,
    return
  }
  func.func @transform_0(%arg0: i32) -> (i32, i32) {
    %c0_i32 = arith.constant 0 : i32
    %c0_i32_0 = arith.constant 0 : i32
    return %arg0, %c0_i32 : i32, i32
  }
  func.func @transform_1(%arg0: i32) -> (i32, i32) {
    %c0_i32 = arith.constant 0 : i32
    %c0_i32_0 = arith.constant 0 : i32
    %c0_i32_1 = arith.constant 0 : i32
    return %c0_i32, %c0_i32_0 : i32, i32
  }
  func.func @transform_2(%arg0: i32) -> (i32, i32) {
    %c0_i32 = arith.constant 0 : i32
    %c0_i32_0 = arith.constant 0 : i32
    %c0_i32_1 = arith.constant 0 : i32
    return %c0_i32, %c0_i32_0 : i32, i32
  }
  func.func @transform_3(%arg0: i32) -> (i32, i32) {
    %c0_i32 = arith.constant 0 : i32
    %c0_i32_0 = arith.constant 0 : i32
    %c0_i32_1 = arith.constant 0 : i32
    return %c0_i32, %c0_i32_0 : i32, i32
  }
  func.func @transform_4(%arg0: i32) -> (i32, i32) {
    %c0_i32 = arith.constant 0 : i32
    %c0_i32_0 = arith.constant 0 : i32
    %c0_i32_1 = arith.constant 0 : i32
    return %c0_i32, %c0_i32_0 : i32, i32
  }
  func.func @transform_5(%arg0: i32) -> (i32, i32) {
    %c0_i32 = arith.constant 0 : i32
    %c0_i32_0 = arith.constant 0 : i32
    %c0_i32_1 = arith.constant 0 : i32
    return %c0_i32, %c0_i32_0 : i32, i32
  }
  func.func @transform_6(%arg0: i32) -> (i32, i32) {
    %c0_i32 = arith.constant 0 : i32
    %c0_i32_0 = arith.constant 0 : i32
    %c0_i32_1 = arith.constant 0 : i32
    return %c0_i32, %c0_i32_0 : i32, i32
  }
  func.func @transform_7(%arg0: i32) -> (i32, i32) {
    %c0_i32 = arith.constant 0 : i32
    %c0_i32_0 = arith.constant 0 : i32
    return %arg0, %c0_i32 : i32, i32
  }
}

</mosaic_0001>

<llo_original>
// kernel: tpu_custom_call.1
$region0: #{tpu_custom_call.1}
  #allocation0 [shape = 'u32[]', space=smem, size = 0x4, offset = 0x4, fixed_abs, tag = 'smem constant byte address 0x4 - core index']
  #allocation1 [shape = 'u32[72,128]{1,0:T(1,128)}', space=vmem, size = 0x9000, scoped, tag = 'internal scratch']
  %s0 = inlined_call_operand.vmem [shape: bf16[256,32], index: 0, kind: input, shape index: {}]
  %s1 = inlined_call_operand.vmem [shape: bf16[32,32], index: 1, kind: input, shape index: {}]
  %s2 = inlined_call_operand.vmem [shape: f32[1,32], index: 2, kind: input, shape index: {}]
  %s3 = inlined_call_operand.vmem [shape: bf16[32,32], index: 3, kind: input, shape index: {}]
  %s4 = inlined_call_operand.vmem [shape: f32[1,32], index: 4, kind: input, shape index: {}]
  %s5 = inlined_call_operand.vmem [shape: bf16[32,256], index: 5, kind: input, shape index: {}]
  %s6 = inlined_call_operand.vmem [shape: f32[1,256], index: 6, kind: input, shape index: {}]
  %s7 = inlined_call_operand.hbm [shape: f32[256,256], index: 7, kind: output, shape index: {}]
  %s8 = sld [smem:[#allocation0]]
  $region61: #{tpu_custom_call.1} parent=0
    _
  %s10 = ssub.s32 1, %s8
  %s11 = scalar_select 0, %s10, %s8
  $region1: #{tpu_custom_call.1} parent=0
    #allocation2 [shape = 'u8[262144]{0}', space=vmem, size = 0x40000, scoped, tag = 'output window, operand 0']
    #allocation3 [shape = 's32[2]{0}', space=sflag, size = 0x8, scoped, tag = 'scoped memory for tpu_custom_call.1']
    %12 = vsyncpa [#allocation3], 0
    %s13 = scalar_lea.sflag [#allocation3], 1
    %14 = vsyncpa %s13, 0
    loop: start=0, step=1, limit=4
    $region2: #{tpu_custom_call.1} parent=1 // loop_pre_header
      _
    $region3: #{tpu_custom_call.1} parent=1 // loop_header
      %s16 = sphi 0, %s20
      %p17 = scmp.ge.s32.totalorder %s16, 4
      %s26 = sphi 0, %s28
      %s29 = sphi 0, %s26
      %s30 = sphi 0, %s29
      %s46 = sphi 0, %s30
      %s50 = sphi 0, %s50
      %s52 = sphi 0, %s50
      %s53 = sphi 0, %s52
      %s67 = sphi 0, %s53
      %s71 = sphi 0, %s71
      %s73 = sphi 0, %s71
      %s74 = sphi 0, %s73
      %s88 = sphi 0, %s74
      %s92 = sphi 0, %s92
      %s94 = sphi 0, %s92
      %s95 = sphi 0, %s94
      %s109 = sphi 0, %s95
      %s113 = sphi 0, %s113
      %s115 = sphi 0, %s113
      %s116 = sphi 0, %s115
      %s130 = sphi 0, %s116
      %s134 = sphi 0, %s134
      %s136 = sphi 0, %s134
      %s137 = sphi 0, %s136
      %s151 = sphi 0, %s137
      %s155 = sphi 0, %s155
      %s157 = sphi 0, %s155
      %s158 = sphi 0, %s157
      %s172 = sphi 0, %s158
      %s178 = sphi 0, %s180
      %s181 = sphi 0, %s178
      %s182 = sphi 0, %s181
      %s198 = sphi 0, %s182
    $region4: #{tpu_custom_call.1} parent=1 // loop_header_branch
      %19 = sbr.rel (%p17) target = $region8
    $region5: #{tpu_custom_call.1} parent=1 // loop_body
      %s21 = ssub.s32 %s16, 1
      %s22 = ssub.s32 %s16, 2
      %s23 = sadd.s32 %s16, 1
      %s24 = ssub.s32 %s16, %s23
      %p25 = scmp.eq.s32.totalorder %s24, 0
      %s27 = sadd.s32 %s26, 1
      %s28 = scalar_select %p25, %s26, %s27
      %p31 = pneg %p25
      %p32 = scmp.eq.s32.totalorder %s16, 1
      %p33 = por %p31, %p32
      %p34 = scmp.ne.s32.totalorder %s26, %s29
      %p35 = scmp.eq.s32.totalorder %s16, 0
      %p36 = por %p34, %p35
      %p37 = scmp.ne.s32.totalorder %s26, %s29
      %p38 = scmp.eq.s32.totalorder %s21, 1
      %p39 = por %p37, %p38
      %p40 = scmp.ne.s32.totalorder %s29, %s30
      %p41 = scmp.eq.s32.totalorder %s21, 0
      %p42 = por %p40, %p41
      %p43 = scmp.ne.s32.totalorder %s29, %s30
      %p44 = scmp.eq.s32.totalorder %s22, 1
      %p45 = por %p43, %p44
      %p47 = scmp.ne.s32.totalorder %s30, %s46
      %p48 = scmp.eq.s32.totalorder %s22, 0
      %p49 = por %p47, %p48
      %s51 = sadd.s32 %s50, 1
      %p54 = scmp.eq.s32.totalorder %s16, 1
      %p55 = scmp.ne.s32.totalorder %s50, %s52
      %p56 = scmp.eq.s32.totalorder %s16, 0
      %p57 = por %p55, %p56
      %p58 = scmp.ne.s32.totalorder %s50, %s52
      %p59 = scmp.eq.s32.totalorder %s21, 1
      %p60 = por %p58, %p59
      %p61 = scmp.ne.s32.totalorder %s52, %s53
      %p62 = scmp.eq.s32.totalorder %s21, 0
      %p63 = por %p61, %p62
      %p64 = scmp.ne.s32.totalorder %s52, %s53
      %p65 = scmp.eq.s32.totalorder %s22, 1
      %p66 = por %p64, %p65
      %p68 = scmp.ne.s32.totalorder %s53, %s67
      %p69 = scmp.eq.s32.totalorder %s22, 0
      %p70 = por %p68, %p69
      %s72 = sadd.s32 %s71, 1
      %p75 = scmp.eq.s32.totalorder %s16, 1
      %p76 = scmp.ne.s32.totalorder %s71, %s73
      %p77 = scmp.eq.s32.totalorder %s16, 0
      %p78 = por %p76, %p77
      %p79 = scmp.ne.s32.totalorder %s71, %s73
      %p80 = scmp.eq.s32.totalorder %s21, 1
      %p81 = por %p79, %p80
      %p82 = scmp.ne.s32.totalorder %s73, %s74
      %p83 = scmp.eq.s32.totalorder %s21, 0
      %p84 = por %p82, %p83
      %p85 = scmp.ne.s32.totalorder %s73, %s74
      %p86 = scmp.eq.s32.totalorder %s22, 1
      %p87 = por %p85, %p86
      %p89 = scmp.ne.s32.totalorder %s74, %s88
      %p90 = scmp.eq.s32.totalorder %s22, 0
      %p91 = por %p89, %p90
      %s93 = sadd.s32 %s92, 1
      %p96 = scmp.eq.s32.totalorder %s16, 1
      %p97 = scmp.ne.s32.totalorder %s92, %s94
      %p98 = scmp.eq.s32.totalorder %s16, 0
      %p99 = por %p97, %p98
      %p100 = scmp.ne.s32.totalorder %s92, %s94
      %p101 = scmp.eq.s32.totalorder %s21, 1
      %p102 = por %p100, %p101
      %p103 = scmp.ne.s32.totalorder %s94, %s95
      %p104 = scmp.eq.s32.totalorder %s21, 0
      %p105 = por %p103, %p104
      %p106 = scmp.ne.s32.totalorder %s94, %s95
      %p107 = scmp.eq.s32.totalorder %s22, 1
      %p108 = por %p106, %p107
      %p110 = scmp.ne.s32.totalorder %s95, %s109
      %p111 = scmp.eq.s32.totalorder %s22, 0
      %p112 = por %p110, %p111
      %s114 = sadd.s32 %s113, 1
      %p117 = scmp.eq.s32.totalorder %s16, 1
      %p118 = scmp.ne.s32.totalorder %s113, %s115
      %p119 = scmp.eq.s32.totalorder %s16, 0
      %p120 = por %p118, %p119
      %p121 = scmp.ne.s32.totalorder %s113, %s115
      %p122 = scmp.eq.s32.totalorder %s21, 1
      %p123 = por %p121, %p122
      %p124 = scmp.ne.s32.totalorder %s115, %s116
      %p125 = scmp.eq.s32.totalorder %s21, 0
      %p126 = por %p124, %p125
      %p127 = scmp.ne.s32.totalorder %s115, %s116
      %p128 = scmp.eq.s32.totalorder %s22, 1
      %p129 = por %p127, %p128
      %p131 = scmp.ne.s32.totalorder %s116, %s130
      %p132 = scmp.eq.s32.totalorder %s22, 0
      %p133 = por %p131, %p132
      %s135 = sadd.s32 %s134, 1
      %p138 = scmp.eq.s32.totalorder %s16, 1
      %p139 = scmp.ne.s32.totalorder %s134, %s136
      %p140 = scmp.eq.s32.totalorder %s16, 0
      %p141 = por %p139, %p140
      %p142 = scmp.ne.s32.totalorder %s134, %s136
      %p143 = scmp.eq.s32.totalorder %s21, 1
      %p144 = por %p142, %p143
      %p145 = scmp.ne.s32.totalorder %s136, %s137
      %p146 = scmp.eq.s32.totalorder %s21, 0
      %p147 = por %p145, %p146
      %p148 = scmp.ne.s32.totalorder %s136, %s137
      %p149 = scmp.eq.s32.totalorder %s22, 1
      %p150 = por %p148, %p149
      %p152 = scmp.ne.s32.totalorder %s137, %s151
      %p153 = scmp.eq.s32.totalorder %s22, 0
      %p154 = por %p152, %p153
      %s156 = sadd.s32 %s155, 1
      %p159 = scmp.eq.s32.totalorder %s16, 1
      %p160 = scmp.ne.s32.totalorder %s155, %s157
      %p161 = scmp.eq.s32.totalorder %s16, 0
      %p162 = por %p160, %p161
      %p163 = scmp.ne.s32.totalorder %s155, %s157
      %p164 = scmp.eq.s32.totalorder %s21, 1
      %p165 = por %p163, %p164
      %p166 = scmp.ne.s32.totalorder %s157, %s158
      %p167 = scmp.eq.s32.totalorder %s21, 0
      %p168 = por %p166, %p167
      %p169 = scmp.ne.s32.totalorder %s157, %s158
      %p170 = scmp.eq.s32.totalorder %s22, 1
      %p171 = por %p169, %p170
      %p173 = scmp.ne.s32.totalorder %s158, %s172
      %p174 = scmp.eq.s32.totalorder %s22, 0
      %p175 = por %p173, %p174
      %s176 = ssub.s32 %s16, %s23
      %p177 = scmp.eq.s32.totalorder %s176, 0
      %s179 = sadd.s32 %s178, 1
      %s180 = scalar_select %p177, %s178, %s179
      %p183 = pneg %p177
      %p184 = scmp.eq.s32.totalorder %s16, 1
      %p185 = por %p183, %p184
      %p186 = scmp.ne.s32.totalorder %s178, %s181
      %p187 = scmp.eq.s32.totalorder %s16, 0
      %p188 = por %p186, %p187
      %p189 = scmp.ne.s32.totalorder %s178, %s181
      %p190 = scmp.eq.s32.totalorder %s21, 1
      %p191 = por %p189, %p190
      %p192 = scmp.ne.s32.totalorder %s181, %s182
      %p193 = scmp.eq.s32.totalorder %s21, 0
      %p194 = por %p192, %p193
      %p195 = scmp.ne.s32.totalorder %s181, %s182
      %p196 = scmp.eq.s32.totalorder %s22, 1
      %p197 = por %p195, %p196
      %p199 = scmp.ne.s32.totalorder %s182, %s198
      %p200 = scmp.eq.s32.totalorder %s22, 0
      %p201 = por %p199, %p200
      %p202 = scmp.le.s32.totalorder 1, %s16
      %p203 = scmp.lt.s32.totalorder %s16, 3
      %p204 = pnand %p202, %p203
      %p205 = pneg %p204
      // Predicated region
      $region9: #{tpu_custom_call.1} parent=5 // pred_check
        _
      $region10: #{tpu_custom_call.1} parent=5 // pred_check_branch
        %207 = sbr.rel (%p204) target = $region12
      $region11: #{tpu_custom_call.1} parent=5 // pred_region
        %s208 = ssub.s32 %s16, 1
        // Predicated region
        $region13: #{tpu_custom_call.1} parent=11 // pred_check
          %p209 = pneg %p63
        $region14: #{tpu_custom_call.1} parent=11 // pred_check_branch
          %211 = sbr.rel (%p209) target = $region16
        $region15: #{tpu_custom_call.1} parent=11 // pred_region
          _
        $region16: #{tpu_custom_call.1} parent=11 // pred_fallthru
          _
        // Predicated region
        $region17: #{tpu_custom_call.1} parent=11 // pred_check
          %p212 = pneg %p84
        $region18: #{tpu_custom_call.1} parent=11 // pred_check_branch
          %214 = sbr.rel (%p212) target = $region20
        $region19: #{tpu_custom_call.1} parent=11 // pred_region
          _
        $region20: #{tpu_custom_call.1} parent=11 // pred_fallthru
          _
        // Predicated region
        $region21: #{tpu_custom_call.1} parent=11 // pred_check
          %p215 = pneg %p105
        $region22: #{tpu_custom_call.1} parent=11 // pred_check_branch
          %217 = sbr.rel (%p215) target = $region24
        $region23: #{tpu_custom_call.1} parent=11 // pred_region
          _
        $region24: #{tpu_custom_call.1} parent=11 // pred_fallthru
          _
        // Predicated region
        $region25: #{tpu_custom_call.1} parent=11 // pred_check
          %p218 = pneg %p126
        $region26: #{tpu_custom_call.1} parent=11 // pred_check_branch
          %220 = sbr.rel (%p218) target = $region28
        $region27: #{tpu_custom_call.1} parent=11 // pred_region
          _
        $region28: #{tpu_custom_call.1} parent=11 // pred_fallthru
          _
        // Predicated region
        $region29: #{tpu_custom_call.1} parent=11 // pred_check
          %p221 = pneg %p147
        $region30: #{tpu_custom_call.1} parent=11 // pred_check_branch
          %223 = sbr.rel (%p221) target = $region32
        $region31: #{tpu_custom_call.1} parent=11 // pred_region
          _
        $region32: #{tpu_custom_call.1} parent=11 // pred_fallthru
          _
        // Predicated region
        $region33: #{tpu_custom_call.1} parent=11 // pred_check
          %p224 = pneg %p168
        $region34: #{tpu_custom_call.1} parent=11 // pred_check_branch
          %226 = sbr.rel (%p224) target = $region36
        $region35: #{tpu_custom_call.1} parent=11 // pred_region
          _
        $region36: #{tpu_custom_call.1} parent=11 // pred_fallthru
          _
      $region12: #{tpu_custom_call.1} parent=5 // pred_fallthru
        _
      %p227 = scmp.lt.s32.totalorder %s16, 2
      // Predicated region
      $region37: #{tpu_custom_call.1} parent=5 // pred_check
        %p228 = pneg %p227
      $region38: #{tpu_custom_call.1} parent=5 // pred_check_branch
        %230 = sbr.rel (%p228) target = $region40
      $region39: #{tpu_custom_call.1} parent=5 // pred_region
        // Predicated region
        $region41: #{tpu_custom_call.1} parent=39 // pred_check
          %p231 = pneg %p36
        $region42: #{tpu_custom_call.1} parent=39 // pred_check_branch
          %233 = sbr.rel (%p231) target = $region44
        $region43: #{tpu_custom_call.1} parent=39 // pred_region
          %s234 = smul.u32 16, %s16
          %p235 = scmp.lt.s32.totalorder %s234, 31
          %s236 = scalar_select %p235, %s234, 31
          %s237 = smul.addr %s236, 4
          %s238 = scalar_lea.vmem %s0, %s237
          %s239 = smul.u32 16, %s16
        $region44: #{tpu_custom_call.1} parent=39 // pred_fallthru
          _
      $region40: #{tpu_custom_call.1} parent=5 // pred_fallthru
        _
      %p240 = scmp.le.s32.totalorder 1, %s16
      %p241 = scmp.lt.s32.totalorder %s16, 3
      %p242 = pnand %p240, %p241
      %p243 = pneg %p242
      // Predicated region
      $region45: #{tpu_custom_call.1} parent=5 // pred_check
        _
      $region46: #{tpu_custom_call.1} parent=5 // pred_check_branch
        %245 = sbr.rel (%p242) target = $region48
      $region47: #{tpu_custom_call.1} parent=5 // pred_region
        %s246 = ssub.s32 %s16, 1
        %s247 = smul.u32 16, %s21
        %p248 = scmp.lt.s32.totalorder %s247, 31
        %s249 = scalar_select %p248, %s247, 31
        %s250 = smul.addr %s249, 4
        %s251 = scalar_lea.vmem %s0, %s250
        %p252 = pneg %p42
        %p253 = pneg %p39
        %p254 = pneg %p63
        %p255 = pneg %p60
        %p256 = pneg %p84
        %p257 = pneg %p81
        %p258 = pneg %p105
        %p259 = pneg %p102
        %p260 = pneg %p126
        %p261 = pneg %p123
        %p262 = pneg %p147
        %p263 = pneg %p144
        %p264 = pneg %p168
        %p265 = pneg %p165
        %p266 = pneg %p194
        %p267 = pneg %p191
        %s268 = sand.u32 %s181, 1
        %s269 = scalar_lea.sflag [#allocation3], %s268
        %s270 = sand.u32 %s181, 1
        %s271 = smul.addr %s270, 256
        %s272 = scalar_lea.vmem [#allocation2], %s271
        %s273 = smul.u32 16, %s21
        %p274 = scmp.lt.s32.totalorder %s273, 31
        %s275 = scalar_select %p274, %s273, 31
        %s276 = smul.addr %s275, 4
        %s277 = scalar_lea.vmem %s0, %s276
        %s278 = smul.u32 16, %s21
        %s279 = smul.u32 16, %s21
        %v281 = vld [vmem:[%s277] sm:$0xf]
        %v282 = vld [vmem:[%s277 + $0x4] sm:$0xf]
        %v283 = vld [vmem:[%s277 + $0x8] sm:$0xf]
        %v284 = vld [vmem:[%s277 + $0xc] sm:$0xf]
        %v285 = vld [vmem:[%s277 + $0x10] sm:$0xf]
        %v286 = vld [vmem:[%s277 + $0x14] sm:$0xf]
        %v287 = vld [vmem:[%s277 + $0x18] sm:$0xf]
        %v288 = vld [vmem:[%s277 + $0x1c] sm:$0xf]
        %v289 = vld [vmem:[%s277 + $0x20] sm:$0xf]
        %v290 = vld [vmem:[%s277 + $0x24] sm:$0xf]
        %v291 = vld [vmem:[%s277 + $0x28] sm:$0xf]
        %v292 = vld [vmem:[%s277 + $0x2c] sm:$0xf]
        %v293 = vld [vmem:[%s277 + $0x30] sm:$0xf]
        %v294 = vld [vmem:[%s277 + $0x34] sm:$0xf]
        %v295 = vld [vmem:[%s277 + $0x38] sm:$0xf]
        %v296 = vld [vmem:[%s277 + $0x3c] sm:$0xf]
        %v297 = vld [vmem:[%s1] sm:$0xf]
        %v298 = vld [vmem:[%s1 + $0x4] sm:$0xf]
        %v299 = vld [vmem:[%s1 + $0x8] sm:$0xf]
        %v300 = vld [vmem:[%s1 + $0xc] sm:$0xf]
        %v301 = vld [vmem:[%s2] sm:$0x1]
        %v303 = vperm.slane %v301, 0
        %v321 = vunpack.c.l.b16 %v281
        %v322 = vunpack.c.l.b16 %v282
        %v323 = vunpack.c.l.b16 %v283
        %v324 = vunpack.c.l.b16 %v284
        %v325 = vunpack.c.l.b16 %v285
        %v326 = vunpack.c.l.b16 %v286
        %v327 = vunpack.c.l.b16 %v287
        %v328 = vunpack.c.l.b16 %v288
        %v329 = vunpack.c.l.b16 %v289
        %v330 = vunpack.c.l.b16 %v290
        %v331 = vunpack.c.l.b16 %v291
        %v332 = vunpack.c.l.b16 %v292
        %v333 = vunpack.c.l.b16 %v293
        %v334 = vunpack.c.l.b16 %v294
        %v335 = vunpack.c.l.b16 %v295
        %v336 = vunpack.c.l.b16 %v296
        %v337 = vpack.c.b16 %v322, %v321
        %v338 = vpack.c.b16 %v324, %v323
        %v339 = vpack.c.b16 %v326, %v325
        %v340 = vpack.c.b16 %v328, %v327
        %v341 = vpack.c.b16 %v330, %v329
        %v342 = vpack.c.b16 %v332, %v331
        %v343 = vpack.c.b16 %v334, %v333
        %v344 = vpack.c.b16 %v336, %v335
        %v349 = vunpack.c.l.b16 %v297
        %v350 = vunpack.c.l.b16 %v298
        %v351 = vunpack.c.l.b16 %v299
        %v352 = vunpack.c.l.b16 %v300
        %v353 = vpack.c.b16 %v350, %v349
        %v354 = vpack.c.b16 %v352, %v351
        %vm357 = vcmask 261120
        %v359 = vsel %vm357, %v337, 0
        %v362 = vsel %vm357, %v338, 0
        %v365 = vsel %vm357, %v339, 0
        %v368 = vsel %vm357, %v340, 0
        %v371 = vsel %vm357, %v341, 0
        %v374 = vsel %vm357, %v342, 0
        %v377 = vsel %vm357, %v343, 0
        %v380 = vsel %vm357, %v344, 0
        %382 = vmatpush.bf16.msra.mxu0 0
        %383 = vmatpush.bf16.msra.mxu0 0
        %384 = vmatpush.bf16.msra.mxu0 0
        %385 = vmatpush.bf16.msra.mxu0 0
        %386 = vmatpush.bf16.msra.mxu0 0
        %387 = vmatpush.bf16.msra.mxu0 0
        %388 = vmatpush.bf16.msra.mxu0 %v354
        %389 = vmatpush.bf16.msra.mxu0 %v353
        %390 = vmatmul.bf16.gmra.mxu0 %v359
        %v391 = vpop.f32.mrf.mxu0
        %v392 = vadd.f32 %v303, %v391
        %v393 = vpop.f32.mrf.mxu0
        %v394 = vadd.f32 %v303, %v393
        %395 = vmatmul.bf16.gmra.mxu0 %v362
        %v396 = vpop.f32.mrf.mxu0
        %v397 = vadd.f32 %v303, %v396
        %v398 = vpop.f32.mrf.mxu0
        %v399 = vadd.f32 %v303, %v398
        %400 = vmatmul.bf16.gmra.mxu0 %v365
        %v401 = vpop.f32.mrf.mxu0
        %v402 = vadd.f32 %v303, %v401
        %v403 = vpop.f32.mrf.mxu0
        %v404 = vadd.f32 %v303, %v403
        %405 = vmatmul.bf16.gmra.mxu0 %v368
        %v406 = vpop.f32.mrf.mxu0
        %v407 = vadd.f32 %v303, %v406
        %v408 = vpop.f32.mrf.mxu0
        %v409 = vadd.f32 %v303, %v408
        %410 = vmatmul.bf16.gmra.mxu0 %v371
        %v411 = vpop.f32.mrf.mxu0
        %v412 = vadd.f32 %v303, %v411
        %v413 = vpop.f32.mrf.mxu0
        %v414 = vadd.f32 %v303, %v413
        %415 = vmatmul.bf16.gmra.mxu0 %v374
        %v416 = vpop.f32.mrf.mxu0
        %v417 = vadd.f32 %v303, %v416
        %v418 = vpop.f32.mrf.mxu0
        %v419 = vadd.f32 %v303, %v418
        %420 = vmatmul.bf16.gmra.mxu0 %v377
        %v421 = vpop.f32.mrf.mxu0
        %v422 = vadd.f32 %v303, %v421
        %v423 = vpop.f32.mrf.mxu0
        %v424 = vadd.f32 %v303, %v423
        %425 = vmatmul.bf16.gmra.mxu0 %v380
        %v426 = vpop.f32.mrf.mxu0
        %v427 = vadd.f32 %v303, %v426
        %v428 = vpop.f32.mrf.mxu0
        %v429 = vadd.f32 %v303, %v428
        %430 = vdwg.mxu0
        %v431 = vmax.f32 %v392, 0.0
        %v432 = vmax.f32 %v394, 0.0
        %v433 = vmax.f32 %v397, 0.0
        %v434 = vmax.f32 %v399, 0.0
        %v435 = vmax.f32 %v402, 0.0
        %v436 = vmax.f32 %v404, 0.0
        %v437 = vmax.f32 %v407, 0.0
        %v438 = vmax.f32 %v409, 0.0
        %v439 = vmax.f32 %v412, 0.0
        %v440 = vmax.f32 %v414, 0.0
        %v441 = vmax.f32 %v417, 0.0
        %v442 = vmax.f32 %v419, 0.0
        %v443 = vmax.f32 %v422, 0.0
        %v444 = vmax.f32 %v424, 0.0
        %v445 = vmax.f32 %v427, 0.0
        %v446 = vmax.f32 %v429, 0.0
        %v447 = vpack.c.bf16 %v432, %v431
        %v448 = vpack.c.bf16 %v434, %v433
        %v449 = vpack.c.bf16 %v436, %v435
        %v450 = vpack.c.bf16 %v438, %v437
        %v451 = vpack.c.bf16 %v440, %v439
        %v452 = vpack.c.bf16 %v442, %v441
        %v453 = vpack.c.bf16 %v444, %v443
        %v454 = vpack.c.bf16 %v446, %v445
        %v455 = vld [vmem:[%s3] sm:$0xf]
        %v456 = vld [vmem:[%s3 + $0x4] sm:$0xf]
        %v457 = vld [vmem:[%s3 + $0x8] sm:$0xf]
        %v458 = vld [vmem:[%s3 + $0xc] sm:$0xf]
        %v459 = vld [vmem:[%s4] sm:$0x1]
        %v461 = vperm.slane %v459, 0
        %v467 = vunpack.c.l.b16 %v455
        %v468 = vunpack.c.l.b16 %v456
        %v469 = vunpack.c.l.b16 %v457
        %v470 = vunpack.c.l.b16 %v458
        %v471 = vpack.c.b16 %v468, %v467
        %v472 = vpack.c.b16 %v470, %v469
        %v476 = vsel %vm357, %v447, 0
        %v479 = vsel %vm357, %v448, 0
        %v482 = vsel %vm357, %v449, 0
        %v485 = vsel %vm357, %v450, 0
        %v488 = vsel %vm357, %v451, 0
        %v491 = vsel %vm357, %v452, 0
        %v494 = vsel %vm357, %v453, 0
        %v497 = vsel %vm357, %v454, 0
        %499 = vmatpush.bf16.msra.mxu0 0
        %500 = vmatpush.bf16.msra.mxu0 0
        %501 = vmatpush.bf16.msra.mxu0 0
        %502 = vmatpush.bf16.msra.mxu0 0
        %503 = vmatpush.bf16.msra.mxu0 0
        %504 = vmatpush.bf16.msra.mxu0 0
        %505 = vmatpush.bf16.msra.mxu0 %v472
        %506 = vmatpush.bf16.msra.mxu0 %v471
        %507 = vmatmul.bf16.gmra.mxu0 %v476
        %v508 = vpop.f32.mrf.mxu0
        %v509 = vadd.f32 %v461, %v508
        %v510 = vpop.f32.mrf.mxu0
        %v511 = vadd.f32 %v461, %v510
        %512 = vmatmul.bf16.gmra.mxu0 %v479
        %v513 = vpop.f32.mrf.mxu0
        %v514 = vadd.f32 %v461, %v513
        %v515 = vpop.f32.mrf.mxu0
        %v516 = vadd.f32 %v461, %v515
        %517 = vmatmul.bf16.gmra.mxu0 %v482
        %v518 = vpop.f32.mrf.mxu0
        %v519 = vadd.f32 %v461, %v518
        %v520 = vpop.f32.mrf.mxu0
        %v521 = vadd.f32 %v461, %v520
        %522 = vmatmul.bf16.gmra.mxu0 %v485
        %v523 = vpop.f32.mrf.mxu0
        %v524 = vadd.f32 %v461, %v523
        %v525 = vpop.f32.mrf.mxu0
        %v526 = vadd.f32 %v461, %v525
        %527 = vmatmul.bf16.gmra.mxu0 %v488
        %v528 = vpop.f32.mrf.mxu0
        %v529 = vadd.f32 %v461, %v528
        %v530 = vpop.f32.mrf.mxu0
        %v531 = vadd.f32 %v461, %v530
        %532 = vmatmul.bf16.gmra.mxu0 %v491
        %v533 = vpop.f32.mrf.mxu0
        %v534 = vadd.f32 %v461, %v533
        %v535 = vpop.f32.mrf.mxu0
        %v536 = vadd.f32 %v461, %v535
        %537 = vmatmul.bf16.gmra.mxu0 %v494
        %v538 = vpop.f32.mrf.mxu0
        %v539 = vadd.f32 %v461, %v538
        %v540 = vpop.f32.mrf.mxu0
        %v541 = vadd.f32 %v461, %v540
        %542 = vmatmul.bf16.gmra.mxu0 %v497
        %v543 = vpop.f32.mrf.mxu0
        %v544 = vadd.f32 %v461, %v543
        %v545 = vpop.f32.mrf.mxu0
        %v546 = vadd.f32 %v461, %v545
        %547 = vdwg.mxu0
        %vm548 = vcmp.ge.f32.partialorder %v509, 0.0
        %vm549 = vcmp.ge.f32.partialorder %v511, 0.0
        %vm550 = vcmp.ge.f32.partialorder %v514, 0.0
        %vm551 = vcmp.ge.f32.partialorder %v516, 0.0
        %vm552 = vcmp.ge.f32.partialorder %v519, 0.0
        %vm553 = vcmp.ge.f32.partialorder %v521, 0.0
        %vm554 = vcmp.ge.f32.partialorder %v524, 0.0
        %vm555 = vcmp.ge.f32.partialorder %v526, 0.0
        %vm556 = vcmp.ge.f32.partialorder %v529, 0.0
        %vm557 = vcmp.ge.f32.partialorder %v531, 0.0
        %vm558 = vcmp.ge.f32.partialorder %v534, 0.0
        %vm559 = vcmp.ge.f32.partialorder %v536, 0.0
        %vm560 = vcmp.ge.f32.partialorder %v539, 0.0
        %vm561 = vcmp.ge.f32.partialorder %v541, 0.0
        %vm562 = vcmp.ge.f32.partialorder %v544, 0.0
        %vm563 = vcmp.ge.f32.partialorder %v546, 0.0
        %v564 = vmul.f32 %v509, 0.2
        %v565 = vmul.f32 %v511, 0.2
        %v566 = vmul.f32 %v514, 0.2
        %v567 = vmul.f32 %v516, 0.2
        %v568 = vmul.f32 %v519, 0.2
        %v569 = vmul.f32 %v521, 0.2
        %v570 = vmul.f32 %v524, 0.2
        %v571 = vmul.f32 %v526, 0.2
        %v572 = vmul.f32 %v529, 0.2
        %v573 = vmul.f32 %v531, 0.2
        %v574 = vmul.f32 %v534, 0.2
        %v575 = vmul.f32 %v536, 0.2
        %v576 = vmul.f32 %v539, 0.2
        %v577 = vmul.f32 %v541, 0.2
        %v578 = vmul.f32 %v544, 0.2
        %v579 = vmul.f32 %v546, 0.2
        %v580 = vsel %vm548, %v509, %v564
        %v581 = vsel %vm549, %v511, %v565
        %v582 = vsel %vm550, %v514, %v566
        %v583 = vsel %vm551, %v516, %v567
        %v584 = vsel %vm552, %v519, %v568
        %v585 = vsel %vm553, %v521, %v569
        %v586 = vsel %vm554, %v524, %v570
        %v587 = vsel %vm555, %v526, %v571
        %v588 = vsel %vm556, %v529, %v572
        %v589 = vsel %vm557, %v531, %v573
        %v590 = vsel %vm558, %v534, %v574
        %v591 = vsel %vm559, %v536, %v575
        %v592 = vsel %vm560, %v539, %v576
        %v593 = vsel %vm561, %v541, %v577
        %v594 = vsel %vm562, %v544, %v578
        %v595 = vsel %vm563, %v546, %v579
        %v596 = vpack.c.bf16 %v581, %v580
        %v597 = vpack.c.bf16 %v583, %v582
        %v598 = vpack.c.bf16 %v585, %v584
        %v599 = vpack.c.bf16 %v587, %v586
        %v600 = vpack.c.bf16 %v589, %v588
        %v601 = vpack.c.bf16 %v591, %v590
        %v602 = vpack.c.bf16 %v593, %v592
        %v603 = vpack.c.bf16 %v595, %v594
        %v604 = vld [vmem:[%s5] sm:$0xff]
        %v605 = vld [vmem:[%s5 + $0x8] sm:$0xff]
        %v606 = vld [vmem:[%s5 + $0x10] sm:$0xff]
        %v607 = vld [vmem:[%s5 + $0x18] sm:$0xff]
        %v608 = vld [vmem:[%s6] sm:$0x3]
        %v610 = vperm.slane %v608, 0
        %v611 = vperm.slane %v608, 1
        %v618 = vunpack.c.l.b16 %v604
        %v619 = vunpack.c.h.b16 %v604
        %v620 = vunpack.c.l.b16 %v605
        %v621 = vunpack.c.h.b16 %v605
        %v622 = vunpack.c.l.b16 %v606
        %v623 = vunpack.c.h.b16 %v606
        %v624 = vunpack.c.l.b16 %v607
        %v625 = vunpack.c.h.b16 %v607
        %v626 = vpack.c.b16 %v620, %v618
        %v627 = vpack.c.b16 %v621, %v619
        %v628 = vpack.c.b16 %v624, %v622
        %v629 = vpack.c.b16 %v625, %v623
        %v635 = vsel %vm357, %v596, 0
        %v638 = vsel %vm357, %v597, 0
        %v641 = vsel %vm357, %v598, 0
        %v644 = vsel %vm357, %v599, 0
        %v647 = vsel %vm357, %v600, 0
        %v650 = vsel %vm357, %v601, 0
        %v653 = vsel %vm357, %v602, 0
        %v656 = vsel %vm357, %v603, 0
        %658 = vmatpush.bf16.msra.mxu0 0
        %659 = vmatpush.bf16.msra.mxu0 0
        %660 = vmatpush.bf16.msra.mxu0 0
        %661 = vmatpush.bf16.msra.mxu0 0
        %662 = vmatpush.bf16.msra.mxu0 0
        %663 = vmatpush.bf16.msra.mxu0 0
        %664 = vmatpush.bf16.msra.mxu0 %v628
        %665 = vmatpush.bf16.msra.mxu0 %v626
        %666 = vmatmul.bf16.gmra.mxu0 %v635
        %v667 = vpop.f32.mrf.mxu0
        %v668 = vadd.f32 %v610, %v667
        %v669 = vpop.f32.mrf.mxu0
        %v670 = vadd.f32 %v610, %v669
        %671 = vmatmul.bf16.gmra.mxu0 %v638
        %v672 = vpop.f32.mrf.mxu0
        %v673 = vadd.f32 %v610, %v672
        %v674 = vpop.f32.mrf.mxu0
        %v675 = vadd.f32 %v610, %v674
        %676 = vmatmul.bf16.gmra.mxu0 %v641
        %v677 = vpop.f32.mrf.mxu0
        %v678 = vadd.f32 %v610, %v677
        %v679 = vpop.f32.mrf.mxu0
        %v680 = vadd.f32 %v610, %v679
        %681 = vmatmul.bf16.gmra.mxu0 %v644
        %v682 = vpop.f32.mrf.mxu0
        %v683 = vadd.f32 %v610, %v682
        %v684 = vpop.f32.mrf.mxu0
        %v685 = vadd.f32 %v610, %v684
        %686 = vmatmul.bf16.gmra.mxu0 %v647
        %v687 = vpop.f32.mrf.mxu0
        %v688 = vadd.f32 %v610, %v687
        %v689 = vpop.f32.mrf.mxu0
        %v690 = vadd.f32 %v610, %v689
        %691 = vmatmul.bf16.gmra.mxu0 %v650
        %v692 = vpop.f32.mrf.mxu0
        %v693 = vadd.f32 %v610, %v692
        %v694 = vpop.f32.mrf.mxu0
        %v695 = vadd.f32 %v610, %v694
        %696 = vmatmul.bf16.gmra.mxu0 %v653
        %v697 = vpop.f32.mrf.mxu0
        %v698 = vadd.f32 %v610, %v697
        %v699 = vpop.f32.mrf.mxu0
        %v700 = vadd.f32 %v610, %v699
        %701 = vmatmul.bf16.gmra.mxu0 %v656
        %v702 = vpop.f32.mrf.mxu0
        %v703 = vadd.f32 %v610, %v702
        %v704 = vpop.f32.mrf.mxu0
        %v705 = vadd.f32 %v610, %v704
        %706 = vdwg.mxu0
        %707 = vmatpush.bf16.msra.mxu0 0
        %708 = vmatpush.bf16.msra.mxu0 0
        %709 = vmatpush.bf16.msra.mxu0 0
        %710 = vmatpush.bf16.msra.mxu0 0
        %711 = vmatpush.bf16.msra.mxu0 0
        %712 = vmatpush.bf16.msra.mxu0 0
        %713 = vmatpush.bf16.msra.mxu0 %v629
        %714 = vmatpush.bf16.msra.mxu0 %v627
        %715 = vmatmul.bf16.gmra.mxu0 %v635
        %v716 = vpop.f32.mrf.mxu0
        %v717 = vadd.f32 %v611, %v716
        %v718 = vpop.f32.mrf.mxu0
        %v719 = vadd.f32 %v611, %v718
        %720 = vmatmul.bf16.gmra.mxu0 %v638
        %v721 = vpop.f32.mrf.mxu0
        %v722 = vadd.f32 %v611, %v721
        %v723 = vpop.f32.mrf.mxu0
        %v724 = vadd.f32 %v611, %v723
        %725 = vmatmul.bf16.gmra.mxu0 %v641
        %v726 = vpop.f32.mrf.mxu0
        %v727 = vadd.f32 %v611, %v726
        %v728 = vpop.f32.mrf.mxu0
        %v729 = vadd.f32 %v611, %v728
        %730 = vmatmul.bf16.gmra.mxu0 %v644
        %v731 = vpop.f32.mrf.mxu0
        %v732 = vadd.f32 %v611, %v731
        %v733 = vpop.f32.mrf.mxu0
        %v734 = vadd.f32 %v611, %v733
        %735 = vmatmul.bf16.gmra.mxu0 %v647
        %v736 = vpop.f32.mrf.mxu0
        %v737 = vadd.f32 %v611, %v736
        %v738 = vpop.f32.mrf.mxu0
        %v739 = vadd.f32 %v611, %v738
        %740 = vmatmul.bf16.gmra.mxu0 %v650
        %v741 = vpop.f32.mrf.mxu0
        %v742 = vadd.f32 %v611, %v741
        %v743 = vpop.f32.mrf.mxu0
        %v744 = vadd.f32 %v611, %v743
        %745 = vmatmul.bf16.gmra.mxu0 %v653
        %v746 = vpop.f32.mrf.mxu0
        %v747 = vadd.f32 %v611, %v746
        %v748 = vpop.f32.mrf.mxu0
        %v749 = vadd.f32 %v611, %v748
        %750 = vmatmul.bf16.gmra.mxu0 %v656
        %v751 = vpop.f32.mrf.mxu0
        %v752 = vadd.f32 %v611, %v751
        %v753 = vpop.f32.mrf.mxu0
        %v754 = vadd.f32 %v611, %v753
        %755 = vdwg.mxu0
        %v756 = vlaneseq
        %v757 = vand.u32 %v756, 127
        %v758 = vadd.s32 %v757, 128
        %vm759 = vcmp.lt.s32.totalorder %v757, 0
        %v760 = vsub.s32 0, %v757
        %v761 = vsel %vm759, %v760, %v757
        %v762 = vshrl.u32 %v761, 1
        %v763 = vand.u32 %v761, 1
        %v764 = vsub.s32 0, %v763
        %v765 = vsel %vm759, %v764, %v763
        %vm766 = vcmp.lt.s32.totalorder %v758, 0
        %v767 = vsub.s32 0, %v758
        %v768 = vsel %vm766, %v767, %v758
        %v769 = vshrl.u32 %v768, 1
        %v770 = vand.u32 %v768, 1
        %v771 = vsub.s32 0, %v770
        %v772 = vsel %vm766, %v771, %v770
        %vm773 = vcmp.ne.s32.totalorder %v765, 0
        %vm774 = vcmp.ne.s32.totalorder %v772, 0
        %vm775 = vcmp.lt.s32.totalorder %v765, 0
        %vm776 = vcmp.lt.s32.totalorder %v772, 0
        %vm777 = vmand %vm775, %vm773
        %vm778 = vmand %vm776, %vm774
        %v779 = vadd.s32 %v765, 2
        %v780 = vadd.s32 %v772, 2
        %v781 = vsel %vm777, %v779, %v765
        %v782 = vsel %vm778, %v780, %v772
        %vm783 = vcmp.eq.s32.totalorder %v781, 0
        %vm784 = vcmp.eq.s32.totalorder %v782, 0
        %vm785 = vcmp.ge.f32.partialorder %v668, 0.0
        %vm786 = vcmp.ge.f32.partialorder %v717, 0.0
        %vm787 = vcmp.ge.f32.partialorder %v670, 0.0
        %vm788 = vcmp.ge.f32.partialorder %v719, 0.0
        %vm789 = vcmp.ge.f32.partialorder %v673, 0.0
        %vm790 = vcmp.ge.f32.partialorder %v722, 0.0
        %vm791 = vcmp.ge.f32.partialorder %v675, 0.0
        %vm792 = vcmp.ge.f32.partialorder %v724, 0.0
        %vm793 = vcmp.ge.f32.partialorder %v678, 0.0
        %vm794 = vcmp.ge.f32.partialorder %v727, 0.0
        %vm795 = vcmp.ge.f32.partialorder %v680, 0.0
        %vm796 = vcmp.ge.f32.partialorder %v729, 0.0
        %vm797 = vcmp.ge.f32.partialorder %v683, 0.0
        %vm798 = vcmp.ge.f32.partialorder %v732, 0.0
        %vm799 = vcmp.ge.f32.partialorder %v685, 0.0
        %vm800 = vcmp.ge.f32.partialorder %v734, 0.0
        %vm801 = vcmp.ge.f32.partialorder %v688, 0.0
        %vm802 = vcmp.ge.f32.partialorder %v737, 0.0
        %vm803 = vcmp.ge.f32.partialorder %v690, 0.0
        %vm804 = vcmp.ge.f32.partialorder %v739, 0.0
        %vm805 = vcmp.ge.f32.partialorder %v693, 0.0
        %vm806 = vcmp.ge.f32.partialorder %v742, 0.0
        %vm807 = vcmp.ge.f32.partialorder %v695, 0.0
        %vm808 = vcmp.ge.f32.partialorder %v744, 0.0
        %vm809 = vcmp.ge.f32.partialorder %v698, 0.0
        %vm810 = vcmp.ge.f32.partialorder %v747, 0.0
        %vm811 = vcmp.ge.f32.partialorder %v700, 0.0
        %vm812 = vcmp.ge.f32.partialorder %v749, 0.0
        %vm813 = vcmp.ge.f32.partialorder %v703, 0.0
        %vm814 = vcmp.ge.f32.partialorder %v752, 0.0
        %vm815 = vcmp.ge.f32.partialorder %v705, 0.0
        %vm816 = vcmp.ge.f32.partialorder %v754, 0.0
        %v817 = vsel %vm785, 1, 0
        %v818 = vsel %vm786, 1, 0
        %v819 = vsel %vm787, 1, 0
        %v820 = vsel %vm788, 1, 0
        %v821 = vsel %vm789, 1, 0
        %v822 = vsel %vm790, 1, 0
        %v823 = vsel %vm791, 1, 0
        %v824 = vsel %vm792, 1, 0
        %v825 = vsel %vm793, 1, 0
        %v826 = vsel %vm794, 1, 0
        %v827 = vsel %vm795, 1, 0
        %v828 = vsel %vm796, 1, 0
        %v829 = vsel %vm797, 1, 0
        %v830 = vsel %vm798, 1, 0
        %v831 = vsel %vm799, 1, 0
        %v832 = vsel %vm800, 1, 0
        %v833 = vsel %vm801, 1, 0
        %v834 = vsel %vm802, 1, 0
        %v835 = vsel %vm803, 1, 0
        %v836 = vsel %vm804, 1, 0
        %v837 = vsel %vm805, 1, 0
        %v838 = vsel %vm806, 1, 0
        %v839 = vsel %vm807, 1, 0
        %v840 = vsel %vm808, 1, 0
        %v841 = vsel %vm809, 1, 0
        %v842 = vsel %vm810, 1, 0
        %v843 = vsel %vm811, 1, 0
        %v844 = vsel %vm812, 1, 0
        %v845 = vsel %vm813, 1, 0
        %v846 = vsel %vm814, 1, 0
        %v847 = vsel %vm815, 1, 0
        %v848 = vsel %vm816, 1, 0
        %v849 = vcvt.s32.f32 %v817
        %v850 = vcvt.s32.f32 %v818
        %v851 = vcvt.s32.f32 %v819
        %v852 = vcvt.s32.f32 %v820
        %v853 = vcvt.s32.f32 %v821
        %v854 = vcvt.s32.f32 %v822
        %v855 = vcvt.s32.f32 %v823
        %v856 = vcvt.s32.f32 %v824
        %v857 = vcvt.s32.f32 %v825
        %v858 = vcvt.s32.f32 %v826
        %v859 = vcvt.s32.f32 %v827
        %v860 = vcvt.s32.f32 %v828
        %v861 = vcvt.s32.f32 %v829
        %v862 = vcvt.s32.f32 %v830
        %v863 = vcvt.s32.f32 %v831
        %v864 = vcvt.s32.f32 %v832
        %v865 = vcvt.s32.f32 %v833
        %v866 = vcvt.s32.f32 %v834
        %v867 = vcvt.s32.f32 %v835
        %v868 = vcvt.s32.f32 %v836
        %v869 = vcvt.s32.f32 %v837
        %v870 = vcvt.s32.f32 %v838
        %v871 = vcvt.s32.f32 %v839
        %v872 = vcvt.s32.f32 %v840
        %v873 = vcvt.s32.f32 %v841
        %v874 = vcvt.s32.f32 %v842
        %v875 = vcvt.s32.f32 %v843
        %v876 = vcvt.s32.f32 %v844
        %v877 = vcvt.s32.f32 %v845
        %v878 = vcvt.s32.f32 %v846
        %v879 = vcvt.s32.f32 %v847
        %v880 = vcvt.s32.f32 %v848
        %vm881 = vcmp.gt.f32.partialorder %v668, 0.0
        %vm882 = vcmp.gt.f32.partialorder %v717, 0.0
        %vm883 = vcmp.gt.f32.partialorder %v670, 0.0
        %vm884 = vcmp.gt.f32.partialorder %v719, 0.0
        %vm885 = vcmp.gt.f32.partialorder %v673, 0.0
        %vm886 = vcmp.gt.f32.partialorder %v722, 0.0
        %vm887 = vcmp.gt.f32.partialorder %v675, 0.0
        %vm888 = vcmp.gt.f32.partialorder %v724, 0.0
        %vm889 = vcmp.gt.f32.partialorder %v678, 0.0
        %vm890 = vcmp.gt.f32.partialorder %v727, 0.0
        %vm891 = vcmp.gt.f32.partialorder %v680, 0.0
        %vm892 = vcmp.gt.f32.partialorder %v729, 0.0
        %vm893 = vcmp.gt.f32.partialorder %v683, 0.0
        %vm894 = vcmp.gt.f32.partialorder %v732, 0.0
        %vm895 = vcmp.gt.f32.partialorder %v685, 0.0
        %vm896 = vcmp.gt.f32.partialorder %v734, 0.0
        %vm897 = vcmp.gt.f32.partialorder %v688, 0.0
        %vm898 = vcmp.gt.f32.partialorder %v737, 0.0
        %vm899 = vcmp.gt.f32.partialorder %v690, 0.0
        %vm900 = vcmp.gt.f32.partialorder %v739, 0.0
        %vm901 = vcmp.gt.f32.partialorder %v693, 0.0
        %vm902 = vcmp.gt.f32.partialorder %v742, 0.0
        %vm903 = vcmp.gt.f32.partialorder %v695, 0.0
        %vm904 = vcmp.gt.f32.partialorder %v744, 0.0
        %vm905 = vcmp.gt.f32.partialorder %v698, 0.0
        %vm906 = vcmp.gt.f32.partialorder %v747, 0.0
        %vm907 = vcmp.gt.f32.partialorder %v700, 0.0
        %vm908 = vcmp.gt.f32.partialorder %v749, 0.0
        %vm909 = vcmp.gt.f32.partialorder %v703, 0.0
        %vm910 = vcmp.gt.f32.partialorder %v752, 0.0
        %vm911 = vcmp.gt.f32.partialorder %v705, 0.0
        %vm912 = vcmp.gt.f32.partialorder %v754, 0.0
        %v913 = vsel %vm881, 1, 0
        %v914 = vsel %vm882, 1, 0
        %v915 = vsel %vm883, 1, 0
        %v916 = vsel %vm884, 1, 0
        %v917 = vsel %vm885, 1, 0
        %v918 = vsel %vm886, 1, 0
        %v919 = vsel %vm887, 1, 0
        %v920 = vsel %vm888, 1, 0
        %v921 = vsel %vm889, 1, 0
        %v922 = vsel %vm890, 1, 0
        %v923 = vsel %vm891, 1, 0
        %v924 = vsel %vm892, 1, 0
        %v925 = vsel %vm893, 1, 0
        %v926 = vsel %vm894, 1, 0
        %v927 = vsel %vm895, 1, 0
        %v928 = vsel %vm896, 1, 0
        %v929 = vsel %vm897, 1, 0
        %v930 = vsel %vm898, 1, 0
        %v931 = vsel %vm899, 1, 0
        %v932 = vsel %vm900, 1, 0
        %v933 = vsel %vm901, 1, 0
        %v934 = vsel %vm902, 1, 0
        %v935 = vsel %vm903, 1, 0
        %v936 = vsel %vm904, 1, 0
        %v937 = vsel %vm905, 1, 0
        %v938 = vsel %vm906, 1, 0
        %v939 = vsel %vm907, 1, 0
        %v940 = vsel %vm908, 1, 0
        %v941 = vsel %vm909, 1, 0
        %v942 = vsel %vm910, 1, 0
        %v943 = vsel %vm911, 1, 0
        %v944 = vsel %vm912, 1, 0
        %v945 = vcvt.s32.f32 %v913
        %v946 = vcvt.s32.f32 %v914
        %v947 = vcvt.s32.f32 %v915
        %v948 = vcvt.s32.f32 %v916
        %v949 = vcvt.s32.f32 %v917
        %v950 = vcvt.s32.f32 %v918
        %v951 = vcvt.s32.f32 %v919
        %v952 = vcvt.s32.f32 %v920
        %v953 = vcvt.s32.f32 %v921
        %v954 = vcvt.s32.f32 %v922
        %v955 = vcvt.s32.f32 %v923
        %v956 = vcvt.s32.f32 %v924
        %v957 = vcvt.s32.f32 %v925
        %v958 = vcvt.s32.f32 %v926
        %v959 = vcvt.s32.f32 %v927
        %v960 = vcvt.s32.f32 %v928
        %v961 = vcvt.s32.f32 %v929
        %v962 = vcvt.s32.f32 %v930
        %v963 = vcvt.s32.f32 %v931
        %v964 = vcvt.s32.f32 %v932
        %v965 = vcvt.s32.f32 %v933
        %v966 = vcvt.s32.f32 %v934
        %v967 = vcvt.s32.f32 %v935
        %v968 = vcvt.s32.f32 %v936
        %v969 = vcvt.s32.f32 %v937
        %v970 = vcvt.s32.f32 %v938
        %v971 = vcvt.s32.f32 %v939
        %v972 = vcvt.s32.f32 %v940
        %v973 = vcvt.s32.f32 %v941
        %v974 = vcvt.s32.f32 %v942
        %v975 = vcvt.s32.f32 %v943
        %v976 = vcvt.s32.f32 %v944
        %v977 = vsel %vm783, %v849, %v945
        %v978 = vsel %vm784, %v850, %v946
        %v979 = vsel %vm783, %v851, %v947
        %v980 = vsel %vm784, %v852, %v948
        %v981 = vsel %vm783, %v853, %v949
        %v982 = vsel %vm784, %v854, %v950
        %v983 = vsel %vm783, %v855, %v951
        %v984 = vsel %vm784, %v856, %v952
        %v985 = vsel %vm783, %v857, %v953
        %v986 = vsel %vm784, %v858, %v954
        %v987 = vsel %vm783, %v859, %v955
        %v988 = vsel %vm784, %v860, %v956
        %v989 = vsel %vm783, %v861, %v957
        %v990 = vsel %vm784, %v862, %v958
        %v991 = vsel %vm783, %v863, %v959
        %v992 = vsel %vm784, %v864, %v960
        %v993 = vsel %vm783, %v865, %v961
        %v994 = vsel %vm784, %v866, %v962
        %v995 = vsel %vm783, %v867, %v963
        %v996 = vsel %vm784, %v868, %v964
        %v997 = vsel %vm783, %v869, %v965
        %v998 = vsel %vm784, %v870, %v966
        %v999 = vsel %vm783, %v871, %v967
        %v1000 = vsel %vm784, %v872, %v968
        %v1001 = vsel %vm783, %v873, %v969
        %v1002 = vsel %vm784, %v874, %v970
        %v1003 = vsel %vm783, %v875, %v971
        %v1004 = vsel %vm784, %v876, %v972
        %v1005 = vsel %vm783, %v877, %v973
        %v1006 = vsel %vm784, %v878, %v974
        %v1007 = vsel %vm783, %v879, %v975
        %v1008 = vsel %vm784, %v880, %v976
        %1009 = vst [vmem:[%s272] sm:$0xff] %v977
        %1010 = vst [vmem:[%s272 + $0x8] sm:$0xff] %v978
        %1011 = vst [vmem:[%s272 + $0x10] sm:$0xff] %v979
        %1012 = vst [vmem:[%s272 + $0x18] sm:$0xff] %v980
        %1013 = vst [vmem:[%s272 + $0x20] sm:$0xff] %v981
        %1014 = vst [vmem:[%s272 + $0x28] sm:$0xff] %v982
        %1015 = vst [vmem:[%s272 + $0x30] sm:$0xff] %v983
        %1016 = vst [vmem:[%s272 + $0x38] sm:$0xff] %v984
        %1017 = vst [vmem:[%s272 + $0x40] sm:$0xff] %v985
        %1018 = vst [vmem:[%s272 + $0x48] sm:$0xff] %v986
        %1019 = vst [vmem:[%s272 + $0x50] sm:$0xff] %v987
        %1020 = vst [vmem:[%s272 + $0x58] sm:$0xff] %v988
        %1021 = vst [vmem:[%s272 + $0x60] sm:$0xff] %v989
        %1022 = vst [vmem:[%s272 + $0x68] sm:$0xff] %v990
        %1023 = vst [vmem:[%s272 + $0x70] sm:$0xff] %v991
        %1024 = vst [vmem:[%s272 + $0x78] sm:$0xff] %v992
        %1025 = vst [vmem:[%s272 + $0x80] sm:$0xff] %v993
        %1026 = vst [vmem:[%s272 + $0x88] sm:$0xff] %v994
        %1027 = vst [vmem:[%s272 + $0x90] sm:$0xff] %v995
        %1028 = vst [vmem:[%s272 + $0x98] sm:$0xff] %v996
        %1029 = vst [vmem:[%s272 + $0xa0] sm:$0xff] %v997
        %1030 = vst [vmem:[%s272 + $0xa8] sm:$0xff] %v998
        %1031 = vst [vmem:[%s272 + $0xb0] sm:$0xff] %v999
        %1032 = vst [vmem:[%s272 + $0xb8] sm:$0xff] %v1000
        %1033 = vst [vmem:[%s272 + $0xc0] sm:$0xff] %v1001
        %1034 = vst [vmem:[%s272 + $0xc8] sm:$0xff] %v1002
        %1035 = vst [vmem:[%s272 + $0xd0] sm:$0xff] %v1003
        %1036 = vst [vmem:[%s272 + $0xd8] sm:$0xff] %v1004
        %1037 = vst [vmem:[%s272 + $0xe0] sm:$0xff] %v1005
        %1038 = vst [vmem:[%s272 + $0xe8] sm:$0xff] %v1006
        %1039 = vst [vmem:[%s272 + $0xf0] sm:$0xff] %v1007
        %1040 = vst [vmem:[%s272 + $0xf8] sm:$0xff] %v1008
        %s1041 = sand.u32 %s181, 1
        %s1042 = scalar_lea.sflag [#allocation3], %s1041
        %s1043 = sand.u32 %s181, 1
        %s1044 = smul.addr %s1043, 256
        %s1045 = scalar_lea.vmem [#allocation2], %s1044
        // Predicated region
        $region49: #{tpu_custom_call.1} parent=47 // pred_check
          %p1046 = pneg %p191
        $region50: #{tpu_custom_call.1} parent=47 // pred_check_branch
          %1048 = sbr.rel (%p1046) target = $region52
        $region51: #{tpu_custom_call.1} parent=47 // pred_region
          %s1049 = smul.u32 16, %s21
          %1051 = vsyncadd %s1042, 0
          %s1052 = smul.addr %s1049, 2
          %s1053 = smul.addr %s1052, 8
          %s1054 = scalar_lea.hbm %s7, %s1053
          %s1055 = sshll.u32 %s1045, 4
          %s1056 = int_to_ptr.vmem [resolvable:$true] %s1055
          %s1057 = sshll.u32 %s1054, 4
          %s1058 = int_to_ptr.hbm [resolvable:$true] %s1057
          %1063 = dma.vmem_to_hbm [thread:$0]  %s1056, 4096, %s1058, %s1042, 256, 256, 16
        $region52: #{tpu_custom_call.1} parent=47 // pred_fallthru
          _
      $region48: #{tpu_custom_call.1} parent=5 // pred_fallthru
        _
      %p1064 = scmp.le.s32.totalorder 2, %s16
      // Predicated region
      $region53: #{tpu_custom_call.1} parent=5 // pred_check
        %p1065 = pneg %p1064
      $region54: #{tpu_custom_call.1} parent=5 // pred_check_branch
        %1067 = sbr.rel (%p1065) target = $region56
      $region55: #{tpu_custom_call.1} parent=5 // pred_region
        %s1068 = ssub.s32 %s16, 2
        // Predicated region
        $region57: #{tpu_custom_call.1} parent=55 // pred_check
          %p1069 = pneg %p197
        $region58: #{tpu_custom_call.1} parent=55 // pred_check_branch
          %1071 = sbr.rel (%p1069) target = $region60
        $region59: #{tpu_custom_call.1} parent=55 // pred_region
          %s1072 = sand.u32 %s182, 1
          %s1073 = scalar_lea.sflag [#allocation3], %s1072
          %s1074 = sand.u32 %s182, 1
          %s1075 = smul.addr %s1074, 256
          %s1076 = scalar_lea.vmem [#allocation2], %s1075
          %1078 = dma.done %s1073, 4096
        $region60: #{tpu_custom_call.1} parent=55 // pred_fallthru
          _
      $region56: #{tpu_custom_call.1} parent=5 // pred_fallthru
        _
    $region6: #{tpu_custom_call.1} parent=1 // loop_footer
      %s20 = sadd.s32 1, %s16
    $region7: #{tpu_custom_call.1} parent=1 // loop_footer_branch
      %15 = sbr.rel target = $region3
    $region8: #{tpu_custom_call.1} parent=1 // loop_exit
      _
    %1079 = vsyncpa [#allocation3], 1
    %s1080 = scalar_lea.sflag [#allocation3], 1
    %1081 = vsyncpa %s1080, 1

</llo_original>
